<compile_context>
chip_gen: v7x
topology: tpu7x:2x2x1
jax: 0.10.0
libtpu: 0.0.40
codegen_flags: <defaults>
</compile_context>

<pallas_src>
import math
import functools

import jax
import jax.numpy as jnp
from jax import lax
from jax.experimental import pallas as pl
from jax.experimental.pallas import tpu as pltpu


# ---------------------------------------------------------------------------
# helpers
# ---------------------------------------------------------------------------
def _pick_block(total, target):
    """Largest convenient block <= target that divides `total`."""
    if total <= target:
        return total
    for cand in (target, 512, 256, 128, 64, 32, 16, 8):
        if cand <= target and total % cand == 0:
            return cand
    return total


def _compiler_params(dimension_semantics, vmem_need_bytes):
    """CompilerParams with a VMEM limit sized to the per-step tiles."""
    limit = int(min(max(int(vmem_need_bytes), 32 * 1024 * 1024),
                    64 * 1024 * 1024))
    return pltpu.CompilerParams(dimension_semantics=dimension_semantics,
                                vmem_limit_bytes=limit)


# ---------------------------------------------------------------------------
# Fused QKV projection:  q/k/v[M,F] = x[M,F] @ w_{q,k,v}[F,F] + b_{q,k,v}
#   * weights bf16, x cast in-kernel, f32 MXU accumulation, bf16 outputs
#   * grid tiled over rows (M) and output columns (N), both "parallel"
# ---------------------------------------------------------------------------
def _qkv_proj_kernel(x_ref, wq_ref, wk_ref, wv_ref, bq_ref, bk_ref, bv_ref,
                     q_ref, k_ref, v_ref):
    x = x_ref[...].astype(jnp.bfloat16)

    def proj(w_ref, b_ref, o_ref):
        acc = jnp.dot(x, w_ref[...], preferred_element_type=jnp.float32)
        o_ref[...] = (acc + b_ref[...]).astype(o_ref.dtype)

    proj(wq_ref, bq_ref, q_ref)
    proj(wk_ref, bk_ref, k_ref)
    proj(wv_ref, bv_ref, v_ref)


def pallas_qkv_proj(x, wq, wk, wv, bq, bk, bv, *, tile_m=512, tile_n=512):
    """x:[M,K] f32, w*:[K,N] bf16, b*:[1,N] f32 -> (q,k,v) each [M,N] bf16."""
    M, K = x.shape
    N = wq.shape[1]
    tm = _pick_block(M, tile_m)
    tn = _pick_block(N, tile_n)
    gm, gn = M // tm, N // tn

    # rough double-buffered per-step VMEM footprint (bytes)
    need = 2 * (tm * K * 4 + 3 * K * tn * 2 + 3 * tn * 4 + 3 * tm * tn * 2)

    out_sds = jax.ShapeDtypeStruct((M, N), jnp.bfloat16)
    w_spec = pl.BlockSpec((K, tn), lambda i, j: (0, j))
    b_spec = pl.BlockSpec((1, tn), lambda i, j: (0, j))
    o_spec = pl.BlockSpec((tm, tn), lambda i, j: (i, j))

    return pl.pallas_call(
        _qkv_proj_kernel,
        out_shape=(out_sds, out_sds, out_sds),
        grid=(gm, gn),
        in_specs=[
            pl.BlockSpec((tm, K), lambda i, j: (i, 0)),
            w_spec, w_spec, w_spec,
            b_spec, b_spec, b_spec,
        ],
        out_specs=(o_spec, o_spec, o_spec),
        compiler_params=_compiler_params(("parallel", "parallel"), need),
        cost_estimate=pl.CostEstimate(
            flops=2 * M * K * 3 * N,
            transcendentals=0,
            bytes_accessed=4 * M * K + 2 * 3 * K * N + 2 * 3 * M * N + 4 * 3 * N),
    )(x, wq, wk, wv, bq, bk, bv)


# ---------------------------------------------------------------------------
# Flash-style attention with fused output projection.
#   grid = (B, n_q_blocks, n_kv_blocks); kv is the ("arbitrary") reduction
#   axis; online softmax state (m, l, acc) lives in VMEM scratch.
#   Heads are handled as static lane slices of the [tq, F] / [tk, F] blocks
#   (no in-kernel head-split / head-merge transposes).
# ---------------------------------------------------------------------------
def _attn_kernel(allpad_ref,                      # scalar prefetch: [B] i32
                 pad_ref, q_ref, k_ref, v_ref, wo_ref, bo_ref,   # inputs
                 o_ref,                                          # output
                 m_ref, l_ref, acc_ref,                          # scratch
                 *, n_heads, head_dim, scale, block_q, block_kv):
    b = pl.program_id(0)
    qi = pl.program_id(1)
    ki = pl.program_id(2)
    n_kv = pl.num_programs(2)
    H, D = n_heads, head_dim

    @pl.when(ki == 0)
    def _init():
        m_ref[...] = jnp.full(m_ref.shape, -jnp.inf, jnp.float32)
        l_ref[...] = jnp.zeros(l_ref.shape, jnp.float32)
        acc_ref[...] = jnp.zeros(acc_ref.shape, jnp.float32)

    # Skip kv blocks that are entirely in the causally-masked future.
    @pl.when(ki * block_kv < (qi + 1) * block_q)
    def _compute():
        q = q_ref[0] * scale                     # (tq, F) bf16, scale folded in
        k = k_ref[0]                             # (tk, F) bf16
        v = v_ref[0]                             # (tk, F) bf16

        # combined causal + key-padding additive bias, shared by all heads
        row = qi * block_q + lax.broadcasted_iota(
            jnp.int32, (block_q, block_kv), 0)
        col = ki * block_kv + lax.broadcasted_iota(
            jnp.int32, (block_q, block_kv), 1)
        key_pad = pad_ref[0] > 0.5               # (1, tk)
        masked = jnp.logical_or(col > row, key_pad)
        neg = jnp.where(masked, jnp.float32(-1e30), jnp.float32(0.0))

        dn = (((1,), (1,)), ((), ()))            # contract last dims, no batch

        for h in range(H):                       # static unroll over heads
            sl = slice(h * D, (h + 1) * D)
            s = lax.dot_general(q[:, sl], k[:, sl], dn,
                                preferred_element_type=jnp.float32) + neg
            m_prev = m_ref[:, h:h + 1]
            l_prev = l_ref[:, h:h + 1]
            m_new = jnp.maximum(m_prev, jnp.max(s, axis=-1, keepdims=True))
            alpha = jnp.exp(m_prev - m_new)
            p = jnp.exp(s - m_new)
            l_ref[:, h:h + 1] = alpha * l_prev + jnp.sum(p, axis=-1,
                                                         keepdims=True)
            pv = jnp.dot(p.astype(jnp.bfloat16), v[:, sl],
                         preferred_element_type=jnp.float32)
            acc_ref[:, sl] = alpha * acc_ref[:, sl] + pv
            m_ref[:, h:h + 1] = m_new

    @pl.when(ki == n_kv - 1)
    def _finalize():
        all_padded = allpad_ref[b] != 0

        # torch: zero the attention weights of fully-padded batches
        @pl.when(all_padded)
        def _():
            acc_ref[...] = jnp.zeros(acc_ref.shape, jnp.float32)

        @pl.when(jnp.logical_not(all_padded))
        def _():
            inv_l = pl.reciprocal(l_ref[...], approx=True)   # (tq, H)
            for h in range(H):
                sl = slice(h * D, (h + 1) * D)
                acc_ref[:, sl] = acc_ref[:, sl] * inv_l[:, h:h + 1]

        # fused output projection; heads are already merged lane-dense in acc
        attn = acc_ref[...].astype(jnp.bfloat16)             # (tq, F)
        o_ref[0] = (jnp.dot(attn, wo_ref[...],
                            preferred_element_type=jnp.float32)
                    + bo_ref[...]).astype(o_ref.dtype)


def pallas_attention_outproj(allpad, pad_f32, q, k, v, wo, bo, *, n_heads,
                             block_q_target=256, block_kv_target=256):
    """q/k/v:[B,T,F] bf16, pad:[B,1,T] f32, allpad:[B] i32 -> [B,T,F] f32."""
    B, T, F = q.shape
    D = F // n_heads
    bq = _pick_block(T, block_q_target)
    bkv = _pick_block(T, block_kv_target)
    n_q, n_kv = T // bq, T // bkv
    scale = 1.0 / math.sqrt(D)

    kern = functools.partial(_attn_kernel, n_heads=n_heads, head_dim=D,
                             scale=scale, block_q=bq, block_kv=bkv)

    # rough double-buffered per-step VMEM footprint (bytes)
    need = (2 * (bq * F * 2 + 2 * bkv * F * 2 + bkv * 4
                 + F * F * 2 + F * 4 + bq * F * 4)
            + 3 * bq * F * 4 + bq * bkv * 4 * 2)

    grid_spec = pltpu.PrefetchScalarGridSpec(
        num_scalar_prefetch=1,
        grid=(B, n_q, n_kv),
        in_specs=[
            pl.BlockSpec((1, 1, bkv), lambda b, i, j, ap: (b, 0, j)),   # pad
            pl.BlockSpec((1, bq, F), lambda b, i, j, ap: (b, i, 0)),    # q
            pl.BlockSpec((1, bkv, F), lambda b, i, j, ap: (b, j, 0)),   # k
            pl.BlockSpec((1, bkv, F), lambda b, i, j, ap: (b, j, 0)),   # v
            pl.BlockSpec((F, F), lambda b, i, j, ap: (0, 0)),           # out_w
            pl.BlockSpec((1, F), lambda b, i, j, ap: (0, 0)),           # out_b
        ],
        out_specs=pl.BlockSpec((1, bq, F), lambda b, i, j, ap: (b, i, 0)),
        scratch_shapes=[
            pltpu.VMEM((bq, n_heads), jnp.float32),   # m
            pltpu.VMEM((bq, n_heads), jnp.float32),   # l
            pltpu.VMEM((bq, F), jnp.float32),         # acc (heads merged)
        ],
    )

    return pl.pallas_call(
        kern,
        out_shape=jax.ShapeDtypeStruct((B, T, F), jnp.float32),
        grid_spec=grid_spec,
        compiler_params=_compiler_params(
            ("parallel", "parallel", "arbitrary"), need),
        cost_estimate=pl.CostEstimate(
            flops=4 * B * n_heads * T * T * D + 2 * B * T * F * F,
            transcendentals=B * n_heads * T * T,
            bytes_accessed=(2 * 3 * B * T * F + 4 * B * T * F
                            + 2 * F * F + 4 * F + 4 * B * T + 4 * B)),
    )(allpad, pad_f32, q, k, v, wo, bo)


# ---------------------------------------------------------------------------
# Module-level forward (self-attention branch: query is key is value)
# ---------------------------------------------------------------------------
def multihead_attention_forward(x, padding_mask, params, n_heads):
    """x:[B,T,F] f32, padding_mask:[B,T] bool (True = padded key) -> [B,T,F] f32."""
    B, T, F = x.shape

    q, k, v = pallas_qkv_proj(
        x.reshape(B * T, F),
        params["w_q"], params["w_k"], params["w_v"],
        params["b_q"], params["b_k"], params["b_v"])
    q = q.reshape(B, T, F)
    k = k.reshape(B, T, F)
    v = v.reshape(B, T, F)

    pad_f32 = padding_mask.astype(jnp.float32).reshape(B, 1, T)
    allpad = jnp.all(padding_mask, axis=-1).astype(jnp.int32)     # [B]

    return pallas_attention_outproj(
        allpad, pad_f32, q, k, v, params["w_out"], params["b_out"],
        n_heads=n_heads)


# ---------------------------------------------------------------------------
# Plain-JAX f32 reference (faithful to the torch module) for sanity check
# ---------------------------------------------------------------------------
def reference_forward(x, padding_mask, qkv_w, qkv_b, out_w, out_b, n_heads):
    B, T, F = x.shape
    H, D = n_heads, F // n_heads
    qkv = x @ qkv_w.T + qkv_b
    q, k, v = qkv[..., :F], qkv[..., F:2 * F], qkv[..., 2 * F:]
    q = q.reshape(B, T, H, D).transpose(0, 2, 1, 3)
    k = k.reshape(B, T, H, D).transpose(0, 2, 3, 1)
    v = v.reshape(B, T, H, D).transpose(0, 2, 1, 3)
    w = jnp.einsum("bhtd,bhds->bhts", q, k) / math.sqrt(D)
    future = jnp.triu(jnp.ones((T, T), dtype=bool), 1)
    w = jnp.where(future[None, None], -jnp.inf, w)
    w = jnp.where(padding_mask[:, None, None, :], -jnp.inf, w)
    w = jax.nn.softmax(w, axis=-1)
    w = jnp.where(jnp.all(padding_mask, axis=-1)[:, None, None, None], 0.0, w)
    o = jnp.einsum("bhts,bhsd->bhtd", w, v)
    o = o.transpose(0, 2, 1, 3).reshape(B, T, F)
    return o @ out_w.T + out_b


# ---------------------------------------------------------------------------
if __name__ == "__main__":
    B, T, F, H = 2, 8, 32, 4
    dropout = 0.1  # identity at inference

    key = jax.random.PRNGKey(0)
    k_x, k_qw, k_qb, k_ow, k_ob = jax.random.split(key, 5)

    # torch-layout f32 parameters (nn.Linear stores weight as [out, in]):
    #   weights ~ N(0, 0.02), biases ~ U(-1/sqrt(fan_in), 1/sqrt(fan_in)).
    bound = 1.0 / math.sqrt(F)
    qkv_w = 0.02 * jax.random.normal(k_qw, (3 * F, F), jnp.float32)
    qkv_b = jax.random.uniform(k_qb, (3 * F,), jnp.float32, -bound, bound)
    out_w = 0.02 * jax.random.normal(k_ow, (F, F), jnp.float32)
    out_b = jax.random.uniform(k_ob, (F,), jnp.float32, -bound, bound)

    # kernel-side parameters: pre-transposed once to [in, out], split per
    # projection, weights cast to bf16 once (biases kept f32, [1, N]).
    params = {
        "w_q": qkv_w[:F].T.astype(jnp.bfloat16),
        "w_k": qkv_w[F:2 * F].T.astype(jnp.bfloat16),
        "w_v": qkv_w[2 * F:].T.astype(jnp.bfloat16),
        "b_q": qkv_b[:F].reshape(1, F),
        "b_k": qkv_b[F:2 * F].reshape(1, F),
        "b_v": qkv_b[2 * F:].reshape(1, F),
        "w_out": out_w.T.astype(jnp.bfloat16),
        "b_out": out_b.reshape(1, F),
    }

    x = jax.random.normal(k_x, (B, T, F), jnp.float32)
    # batch 0: no padding; batch 1: last 3 key positions padded
    padding_mask = jnp.array(
        [[False] * T,
         [False] * (T - 3) + [True] * 3],
        dtype=bool,
    )

    out = multihead_attention_forward(x, padding_mask, params, H)
    out = jax.block_until_ready(out)

    ref = reference_forward(x, padding_mask, qkv_w, qkv_b, out_w, out_b, H)
    assert out.shape == (B, T, F)
    # bf16 weights/activations with f32 accumulation -> relaxed tolerance.
    assert jnp.allclose(out, ref, atol=2e-2, rtol=2e-2), "mismatch vs reference"

    print("KERNEL_OK")
</pallas_src>

<mosaic_0001>
module attributes {stable_mosaic.version = 11 : i64} {
  func.func @_qkv_proj_kernel(%arg0: i32, %arg1: i32, %arg2: memref<16x32xf32, #tpu.memory_space<vmem>>, %arg3: memref<32x32xbf16, #tpu.memory_space<vmem>>, %arg4: memref<32x32xbf16, #tpu.memory_space<vmem>>, %arg5: memref<32x32xbf16, #tpu.memory_space<vmem>>, %arg6: memref<1x32xf32, #tpu.memory_space<vmem>>, %arg7: memref<1x32xf32, #tpu.memory_space<vmem>>, %arg8: memref<1x32xf32, #tpu.memory_space<vmem>>, %arg9: memref<16x32xbf16, #tpu.memory_space<vmem>>, %arg10: memref<16x32xbf16, #tpu.memory_space<vmem>>, %arg11: memref<16x32xbf16, #tpu.memory_space<vmem>>) attributes {dimension_semantics = [#tpu.dimension_semantics<parallel>, #tpu.dimension_semantics<parallel>], iteration_bounds = array<i64: 1, 1>, scalar_prefetch = 0 : i64, scratch_operands = 0 : i64, tpu.core_type = #tpu.core_type<tc>, window_params = [{transform_indices = @transform_0, window_bounds = array<i64: 16, 32>}, {transform_indices = @transform_1, window_bounds = array<i64: 32, 32>}, {transform_indices = @transform_2, window_bounds = array<i64: 32, 32>}, {transform_indices = @transform_3, window_bounds = array<i64: 32, 32>}, {transform_indices = @transform_4, window_bounds = array<i64: 1, 32>}, {transform_indices = @transform_5, window_bounds = array<i64: 1, 32>}, {transform_indices = @transform_6, window_bounds = array<i64: 1, 32>}, {transform_indices = @transform_7, window_bounds = array<i64: 16, 32>}, {transform_indices = @transform_8, window_bounds = array<i64: 16, 32>}, {transform_indices = @transform_9, window_bounds = array<i64: 16, 32>}]} {
    %c0 = arith.constant 0 : index
    %c0_0 = arith.constant 0 : index
    %0 = vector.load %arg2[%c0, %c0_0] : memref<16x32xf32, #tpu.memory_space<vmem>>, vector<16x32xf32>
    %1 = arith.truncf %0 : vector<16x32xf32> to vector<16x32xbf16>
    %c0_1 = arith.constant 0 : index
    %c0_2 = arith.constant 0 : index
    %2 = vector.load %arg3[%c0_1, %c0_2] : memref<32x32xbf16, #tpu.memory_space<vmem>>, vector<32x32xbf16>
    %cst = arith.constant dense<0.000000e+00> : vector<16x32xf32>
    %3 = tpu.matmul %1, %2, %cst {dimension_numbers = #tpu.dot_dimension_numbers<[1], [0], [0], [1], [0, 0, 1, 1], [], []>} : vector<16x32xbf16>, vector<32x32xbf16>, vector<16x32xf32> -> vector<16x32xf32>
    %c0_3 = arith.constant 0 : index
    %c0_4 = arith.constant 0 : index
    %4 = vector.load %arg6[%c0_3, %c0_4] : memref<1x32xf32, #tpu.memory_space<vmem>>, vector<1x32xf32>
    %5 = vector.broadcast %4 : vector<1x32xf32> to vector<16x32xf32>
    %6 = arith.addf %3, %5 : vector<16x32xf32>
    %7 = arith.truncf %6 : vector<16x32xf32> to vector<16x32xbf16>
    %c0_5 = arith.constant 0 : index
    %c0_6 = arith.constant 0 : index
    %8 = vector.load %arg9[%c0_5, %c0_6] : memref<16x32xbf16, #tpu.memory_space<vmem>>, vector<16x32xbf16>
    tpu.vector_store %arg9[%c0_5, %c0_6], %7 {strides = array<i32>} : memref<16x32xbf16, #tpu.memory_space<vmem>>, vector<16x32xbf16>,
    %c0_7 = arith.constant 0 : index
    %c0_8 = arith.constant 0 : index
    %9 = vector.load %arg4[%c0_7, %c0_8] : memref<32x32xbf16, #tpu.memory_space<vmem>>, vector<32x32xbf16>
    %cst_9 = arith.constant dense<0.000000e+00> : vector<16x32xf32>
    %10 = tpu.matmul %1, %9, %cst_9 {dimension_numbers = #tpu.dot_dimension_numbers<[1], [0], [0], [1], [0, 0, 1, 1], [], []>} : vector<16x32xbf16>, vector<32x32xbf16>, vector<16x32xf32> -> vector<16x32xf32>
    %c0_10 = arith.constant 0 : index
    %c0_11 = arith.constant 0 : index
    %11 = vector.load %arg7[%c0_10, %c0_11] : memref<1x32xf32, #tpu.memory_space<vmem>>, vector<1x32xf32>
    %12 = vector.broadcast %11 : vector<1x32xf32> to vector<16x32xf32>
    %13 = arith.addf %10, %12 : vector<16x32xf32>
    %14 = arith.truncf %13 : vector<16x32xf32> to vector<16x32xbf16>
    %c0_12 = arith.constant 0 : index
    %c0_13 = arith.constant 0 : index
    %15 = vector.load %arg10[%c0_12, %c0_13] : memref<16x32xbf16, #tpu.memory_space<vmem>>, vector<16x32xbf16>
    tpu.vector_store %arg10[%c0_12, %c0_13], %14 {strides = array<i32>} : memref<16x32xbf16, #tpu.memory_space<vmem>>, vector<16x32xbf16>,
    %c0_14 = arith.constant 0 : index
    %c0_15 = arith.constant 0 : index
    %16 = vector.load %arg5[%c0_14, %c0_15] : memref<32x32xbf16, #tpu.memory_space<vmem>>, vector<32x32xbf16>
    %cst_16 = arith.constant dense<0.000000e+00> : vector<16x32xf32>
    %17 = tpu.matmul %1, %16, %cst_16 {dimension_numbers = #tpu.dot_dimension_numbers<[1], [0], [0], [1], [0, 0, 1, 1], [], []>} : vector<16x32xbf16>, vector<32x32xbf16>, vector<16x32xf32> -> vector<16x32xf32>
    %c0_17 = arith.constant 0 : index
    %c0_18 = arith.constant 0 : index
    %18 = vector.load %arg8[%c0_17, %c0_18] : memref<1x32xf32, #tpu.memory_space<vmem>>, vector<1x32xf32>
    %19 = vector.broadcast %18 : vector<1x32xf32> to vector<16x32xf32>
    %20 = arith.addf %17, %19 : vector<16x32xf32>
    %21 = arith.truncf %20 : vector<16x32xf32> to vector<16x32xbf16>
    %c0_19 = arith.constant 0 : index
    %c0_20 = arith.constant 0 : index
    %22 = vector.load %arg11[%c0_19, %c0_20] : memref<16x32xbf16, #tpu.memory_space<vmem>>, vector<16x32xbf16>
    tpu.vector_store %arg11[%c0_19, %c0_20], %21 {strides = array<i32>} : memref<16x32xbf16, #tpu.memory_space<vmem>>, vector<16x32xbf16>,
    return
  }
  func.func @transform_0(%arg0: i32, %arg1: i32) -> (i32, i32) {
    %c0_i32 = arith.constant 0 : i32
    %c0_i32_0 = arith.constant 0 : i32
    return %arg0, %c0_i32 : i32, i32
  }
  func.func @transform_1(%arg0: i32, %arg1: i32) -> (i32, i32) {
    %c0_i32 = arith.constant 0 : i32
    %c0_i32_0 = arith.constant 0 : i32
    return %c0_i32, %arg1 : i32, i32
  }
  func.func @transform_2(%arg0: i32, %arg1: i32) -> (i32, i32) {
    %c0_i32 = arith.constant 0 : i32
    %c0_i32_0 = arith.constant 0 : i32
    return %c0_i32, %arg1 : i32, i32
  }
  func.func @transform_3(%arg0: i32, %arg1: i32) -> (i32, i32) {
    %c0_i32 = arith.constant 0 : i32
    %c0_i32_0 = arith.constant 0 : i32
    return %c0_i32, %arg1 : i32, i32
  }
  func.func @transform_4(%arg0: i32, %arg1: i32) -> (i32, i32) {
    %c0_i32 = arith.constant 0 : i32
    %c0_i32_0 = arith.constant 0 : i32
    return %c0_i32, %arg1 : i32, i32
  }
  func.func @transform_5(%arg0: i32, %arg1: i32) -> (i32, i32) {
    %c0_i32 = arith.constant 0 : i32
    %c0_i32_0 = arith.constant 0 : i32
    return %c0_i32, %arg1 : i32, i32
  }
  func.func @transform_6(%arg0: i32, %arg1: i32) -> (i32, i32) {
    %c0_i32 = arith.constant 0 : i32
    %c0_i32_0 = arith.constant 0 : i32
    return %c0_i32, %arg1 : i32, i32
  }
  func.func @transform_7(%arg0: i32, %arg1: i32) -> (i32, i32) {
    %c0_i32 = arith.constant 0 : i32
    return %arg0, %arg1 : i32, i32
  }
  func.func @transform_8(%arg0: i32, %arg1: i32) -> (i32, i32) {
    %c0_i32 = arith.constant 0 : i32
    return %arg0, %arg1 : i32, i32
  }
  func.func @transform_9(%arg0: i32, %arg1: i32) -> (i32, i32) {
    %c0_i32 = arith.constant 0 : i32
    return %arg0, %arg1 : i32, i32
  }
}

</mosaic_0001>

<llo_original>
// kernel: tpu_custom_call.1
$region0: #{tpu_custom_call.1}
  #allocation0 [shape = 'u32[]', space=smem, size = 0x4, offset = 0x4, fixed_abs, tag = 'smem constant byte address 0x4 - core index']
  #allocation1 [shape = 'u32[144,128]{1,0:T(1,128)}', space=vmem, size = 0x12000, scoped, tag = 'internal scratch']
  %s0 = inlined_call_operand.hbm [shape: f32[16,32], index: 0, kind: input, shape index: {}]
  %s1 = inlined_call_operand.hbm [shape: bf16[32,32], index: 1, kind: input, shape index: {}]
  %s2 = inlined_call_operand.hbm [shape: bf16[32,32], index: 2, kind: input, shape index: {}]
  %s3 = inlined_call_operand.hbm [shape: bf16[32,32], index: 3, kind: input, shape index: {}]
  %s4 = inlined_call_operand.vmem [shape: f32[1,32], index: 4, kind: input, shape index: {}]
  %s5 = inlined_call_operand.vmem [shape: f32[1,32], index: 5, kind: input, shape index: {}]
  %s6 = inlined_call_operand.vmem [shape: f32[1,32], index: 6, kind: input, shape index: {}]
  %s7 = inlined_call_operand.hbm [shape: bf16[16,32], index: 7, kind: output, shape index: {0}]
  %s8 = inlined_call_operand.hbm [shape: bf16[16,32], index: 8, kind: output, shape index: {1}]
  %s9 = inlined_call_operand.hbm [shape: bf16[16,32], index: 9, kind: output, shape index: {2}]
  %10 = xla_tuple %s7, %s8, %s9
  %s11 = sld [smem:[#allocation0]]
  $region70: #{tpu_custom_call.1} parent=0
    _
  %s13 = ssub.s32 1, %s11
  %s14 = scalar_select 0, %s13, %s11
  $region1: #{tpu_custom_call.1} parent=0
    #allocation2 [shape = 'u8[8192]{0}', space=vmem, size = 0x2000, scoped, tag = 'input window, operand 0, single buffered']
    #allocation3 [shape = 's32[1]{0}', space=sflag, size = 0x4, scoped, tag = 'scoped memory for tpu_custom_call.1']
    #allocation4 [shape = 's32[1]{0}', space=sflag, size = 0x4, scoped, tag = 'scoped memory for tpu_custom_call.1']
    #allocation5 [shape = 'u8[8192]{0}', space=vmem, size = 0x2000, scoped, tag = 'input window, operand 1, single buffered']
    #allocation6 [shape = 's32[1]{0}', space=sflag, size = 0x4, scoped, tag = 'scoped memory for tpu_custom_call.1']
    #allocation7 [shape = 'u8[8192]{0}', space=vmem, size = 0x2000, scoped, tag = 'input window, operand 2, single buffered']
    #allocation8 [shape = 'u8[8192]{0}', space=vmem, size = 0x2000, scoped, tag = 'input window, operand 3, single buffered']
    #allocation9 [shape = 's32[1]{0}', space=sflag, size = 0x4, scoped, tag = 'scoped memory for tpu_custom_call.1']
    #allocation10 [shape = 'u8[4096]{0}', space=vmem, size = 0x1000, scoped, tag = 'output window, operand 0, single buffered']
    #allocation11 [shape = 'u8[4096]{0}', space=vmem, size = 0x1000, scoped, tag = 'output window, operand 1, single buffered']
    #allocation12 [shape = 's32[1]{0}', space=sflag, size = 0x4, scoped, tag = 'scoped memory for tpu_custom_call.1']
    #allocation13 [shape = 'u8[4096]{0}', space=vmem, size = 0x1000, scoped, tag = 'output window, operand 2, single buffered']
    %15 = vsyncpa [#allocation3], 0
    %16 = vsyncpa [#allocation6], 0
    %17 = vsyncpa [#allocation9], 0
    %18 = vsyncpa [#allocation4], 0
    %19 = vsyncpa [#allocation12], 0
    // Predicated region
    $region2: #{tpu_custom_call.1} parent=1 // pred_check
      _
    $region3: #{tpu_custom_call.1} parent=1 // pred_check_branch
      %21 = sbr.rel (0) target = $region5
    $region4: #{tpu_custom_call.1} parent=1 // pred_region
      %s23 = ssub.s32 256, 256
      %24 = vsyncadd [#allocation3], %s23
      %s25 = sshll.u32 [#allocation2], 4
      %s26 = int_to_ptr.vmem [resolvable:$true] %s25
      %31 = dma.hbm_to_vmem [thread:$0]  %s0, 256, %s26, [#allocation3], 128, 128, 8
    $region5: #{tpu_custom_call.1} parent=1 // pred_fallthru
      _
    // Predicated region
    $region6: #{tpu_custom_call.1} parent=1 // pred_check
      _
    $region7: #{tpu_custom_call.1} parent=1 // pred_check_branch
      %33 = sbr.rel (0) target = $region9
    $region8: #{tpu_custom_call.1} parent=1 // pred_region
      %s35 = ssub.s32 256, 256
      %36 = vsyncadd [#allocation6], %s35
      %s37 = sshll.u32 [#allocation5], 4
      %s38 = int_to_ptr.vmem [resolvable:$true] %s37
      %43 = dma.hbm_to_vmem [thread:$0]  %s1, 256, %s38, [#allocation6], 64, 64, 4
    $region9: #{tpu_custom_call.1} parent=1 // pred_fallthru
      _
    // Predicated region
    $region10: #{tpu_custom_call.1} parent=1 // pred_check
      _
    $region11: #{tpu_custom_call.1} parent=1 // pred_check_branch
      %45 = sbr.rel (0) target = $region13
    $region12: #{tpu_custom_call.1} parent=1 // pred_region
      %s47 = ssub.s32 256, 256
      %48 = vsyncadd [#allocation6], %s47
      %s49 = sshll.u32 [#allocation7], 4
      %s50 = int_to_ptr.vmem [resolvable:$true] %s49
      %55 = dma.hbm_to_vmem [thread:$0]  %s2, 256, %s50, [#allocation6], 64, 64, 4
    $region13: #{tpu_custom_call.1} parent=1 // pred_fallthru
      _
    // Predicated region
    $region14: #{tpu_custom_call.1} parent=1 // pred_check
      _
    $region15: #{tpu_custom_call.1} parent=1 // pred_check_branch
      %57 = sbr.rel (0) target = $region17
    $region16: #{tpu_custom_call.1} parent=1 // pred_region
      %s59 = ssub.s32 256, 256
      %60 = vsyncadd [#allocation9], %s59
      %s61 = sshll.u32 [#allocation8], 4
      %s62 = int_to_ptr.vmem [resolvable:$true] %s61
      %67 = dma.hbm_to_vmem [thread:$0]  %s3, 256, %s62, [#allocation9], 64, 64, 4
    $region17: #{tpu_custom_call.1} parent=1 // pred_fallthru
      _
    // Predicated region
    $region18: #{tpu_custom_call.1} parent=1 // pred_check
      _
    $region19: #{tpu_custom_call.1} parent=1 // pred_check_branch
      %69 = sbr.rel (0) target = $region21
    $region20: #{tpu_custom_call.1} parent=1 // pred_region
      _
    $region21: #{tpu_custom_call.1} parent=1 // pred_fallthru
      _
    // Predicated region
    $region22: #{tpu_custom_call.1} parent=1 // pred_check
      _
    $region23: #{tpu_custom_call.1} parent=1 // pred_check_branch
      %71 = sbr.rel (0) target = $region25
    $region24: #{tpu_custom_call.1} parent=1 // pred_region
      _
    $region25: #{tpu_custom_call.1} parent=1 // pred_fallthru
      _
    // Predicated region
    $region26: #{tpu_custom_call.1} parent=1 // pred_check
      _
    $region27: #{tpu_custom_call.1} parent=1 // pred_check_branch
      %73 = sbr.rel (0) target = $region29
    $region28: #{tpu_custom_call.1} parent=1 // pred_region
      _
    $region29: #{tpu_custom_call.1} parent=1 // pred_fallthru
      _
    // Predicated region
    $region30: #{tpu_custom_call.1} parent=1 // pred_check
      _
    $region31: #{tpu_custom_call.1} parent=1 // pred_check_branch
      %75 = sbr.rel (0) target = $region33
    $region32: #{tpu_custom_call.1} parent=1 // pred_region
      %76 = dma.done [#allocation3], 256
    $region33: #{tpu_custom_call.1} parent=1 // pred_fallthru
      _
    // Predicated region
    $region34: #{tpu_custom_call.1} parent=1 // pred_check
      _
    $region35: #{tpu_custom_call.1} parent=1 // pred_check_branch
      %78 = sbr.rel (0) target = $region37
    $region36: #{tpu_custom_call.1} parent=1 // pred_region
      %79 = dma.done [#allocation6], 256
    $region37: #{tpu_custom_call.1} parent=1 // pred_fallthru
      _
    // Predicated region
    $region38: #{tpu_custom_call.1} parent=1 // pred_check
      _
    $region39: #{tpu_custom_call.1} parent=1 // pred_check_branch
      %81 = sbr.rel (0) target = $region41
    $region40: #{tpu_custom_call.1} parent=1 // pred_region
      %82 = dma.done [#allocation6], 256
    $region41: #{tpu_custom_call.1} parent=1 // pred_fallthru
      _
    // Predicated region
    $region42: #{tpu_custom_call.1} parent=1 // pred_check
      _
    $region43: #{tpu_custom_call.1} parent=1 // pred_check_branch
      %84 = sbr.rel (0) target = $region45
    $region44: #{tpu_custom_call.1} parent=1 // pred_region
      %85 = dma.done [#allocation9], 256
    $region45: #{tpu_custom_call.1} parent=1 // pred_fallthru
      _
    %v87 = vld [vmem:[#allocation2] sm:$0xff]
    %v88 = vld [vmem:[#allocation2 + $0x8] sm:$0xff]
    %v89 = vpack.c.bf16 %v88, %v87
    %v90 = vld [vmem:[#allocation5] sm:$0xf]
    %v91 = vld [vmem:[#allocation5 + $0x4] sm:$0xf]
    %v92 = vld [vmem:[#allocation5 + $0x8] sm:$0xf]
    %v93 = vld [vmem:[#allocation5 + $0xc] sm:$0xf]
    %v94 = vld [vmem:[%s4] sm:$0x1]
    %v96 = vlaneseq
    %v97 = vshrl.u32 %v96, 7
    %v98 = vsub.s32 0, %v97
    %v99 = vrot.slane %v94, %v98
    %v105 = vunpack.c.l.b16 %v90
    %v106 = vunpack.c.l.b16 %v91
    %v107 = vunpack.c.l.b16 %v92
    %v108 = vunpack.c.l.b16 %v93
    %v109 = vpack.c.b16 %v106, %v105
    %v110 = vpack.c.b16 %v108, %v107
    %vm113 = vcmask 261120
    %v115 = vsel %vm113, %v89, 0
    %117 = vmatprep.subr.bf16.mxu0 0
    %118 = vmatpush1.bf16.msra.mxu0 %v109
    %119 = vmatprep.subr.bf16.mxu0 0
    %120 = vmatpush1.bf16.msra.mxu0 %v110
    %121 = vmatprep.subr.bf16.mxu0 0
    %122 = vmatpush1.bf16.msra.mxu0 0
    %123 = vmatprep.subr.bf16.mxu0 0
    %124 = vmatpush1.bf16.msra.mxu0 0
    %125 = vmatprep.subr.bf16.mxu0 0
    %126 = vmatpush1.bf16.msra.mxu0 0
    %127 = vmatprep.subr.bf16.mxu0 0
    %128 = vmatpush1.bf16.msra.mxu0 0
    %129 = vmatprep.subr.bf16.mxu0 0
    %130 = vmatpush1.bf16.msra.mxu0 0
    %131 = vmatprep.subr.bf16.mxu0 0
    %132 = vmatpush1.bf16.msra.mxu0 0
    %133 = vmatprep.subr.bf16.mxu0 0
    %134 = vmatpush1.bf16.msra.mxu0 0
    %135 = vmatprep.subr.bf16.mxu0 0
    %136 = vmatpush1.bf16.msra.mxu0 0
    %137 = vmatprep.subr.bf16.mxu0 0
    %138 = vmatpush1.bf16.msra.mxu0 0
    %139 = vmatprep.subr.bf16.mxu0 0
    %140 = vmatpush1.bf16.msra.mxu0 0
    %141 = vmatprep.subr.bf16.mxu0 0
    %142 = vmatpush1.bf16.msra.mxu0 0
    %143 = vmatprep.subr.bf16.mxu0 0
    %144 = vmatpush1.bf16.msra.mxu0 0
    %145 = vmatprep.subr.bf16.mxu0 0
    %146 = vmatpush1.bf16.msra.mxu0 0
    %147 = vmatprep.subr.bf16.mxu0 0
    %148 = vmatpush1.bf16.msra.mxu0 0
    %149 = vmatprep.mubr.bf16.mxu0 0
    %150 = vmatmul.mubr.bf16.gmra.mrb[0].mxu0 %v115
    %v151 = vpop.f32.mrb[0].mxu0
    %v152 = vadd.f32 %v99, %v151
    %v153 = vpop.f32.mrb[0].mxu0
    %v154 = vpop.f32.mrb[0].mxu0
    %v155 = vadd.f32 %v99, %v154
    %v156 = vpop.f32.mrb[0].mxu0
    %157 = vdwg.mxu0
    %v158 = vpack.c.bf16 %v155, %v152
    %v160 = vunpack.c.l.b16 %v158
    %v161 = vunpack.c.h.b16 %v158
    %v162 = vpack.c.b16 %v160, %v160
    %v163 = vpack.c.b16 %v161, %v161
    %vm166 = vcmask 257024
    %167 = vst.msk [vmem:[#allocation10] sm:$0xf] %vm166, %v162
    %168 = vst.msk [vmem:[#allocation10 + $0x4] sm:$0xf] %vm166, %v163
    %v169 = vld [vmem:[#allocation7] sm:$0xf]
    %v170 = vld [vmem:[#allocation7 + $0x4] sm:$0xf]
    %v171 = vld [vmem:[#allocation7 + $0x8] sm:$0xf]
    %v172 = vld [vmem:[#allocation7 + $0xc] sm:$0xf]
    %v173 = vld [vmem:[%s5] sm:$0x1]
    %v175 = vlaneseq
    %v176 = vshrl.u32 %v175, 7
    %v177 = vsub.s32 0, %v176
    %v178 = vrot.slane %v173, %v177
    %v184 = vunpack.c.l.b16 %v169
    %v185 = vunpack.c.l.b16 %v170
    %v186 = vunpack.c.l.b16 %v171
    %v187 = vunpack.c.l.b16 %v172
    %v188 = vpack.c.b16 %v185, %v184
    %v189 = vpack.c.b16 %v187, %v186
    %192 = vmatprep.subr.bf16.mxu0 0
    %193 = vmatpush1.bf16.msra.mxu0 %v188
    %194 = vmatprep.subr.bf16.mxu0 0
    %195 = vmatpush1.bf16.msra.mxu0 %v189
    %196 = vmatprep.subr.bf16.mxu0 0
    %197 = vmatpush1.bf16.msra.mxu0 0
    %198 = vmatprep.subr.bf16.mxu0 0
    %199 = vmatpush1.bf16.msra.mxu0 0
    %200 = vmatprep.subr.bf16.mxu0 0
    %201 = vmatpush1.bf16.msra.mxu0 0
    %202 = vmatprep.subr.bf16.mxu0 0
    %203 = vmatpush1.bf16.msra.mxu0 0
    %204 = vmatprep.subr.bf16.mxu0 0
    %205 = vmatpush1.bf16.msra.mxu0 0
    %206 = vmatprep.subr.bf16.mxu0 0
    %207 = vmatpush1.bf16.msra.mxu0 0
    %208 = vmatprep.subr.bf16.mxu0 0
    %209 = vmatpush1.bf16.msra.mxu0 0
    %210 = vmatprep.subr.bf16.mxu0 0
    %211 = vmatpush1.bf16.msra.mxu0 0
    %212 = vmatprep.subr.bf16.mxu0 0
    %213 = vmatpush1.bf16.msra.mxu0 0
    %214 = vmatprep.subr.bf16.mxu0 0
    %215 = vmatpush1.bf16.msra.mxu0 0
    %216 = vmatprep.subr.bf16.mxu0 0
    %217 = vmatpush1.bf16.msra.mxu0 0
    %218 = vmatprep.subr.bf16.mxu0 0
    %219 = vmatpush1.bf16.msra.mxu0 0
    %220 = vmatprep.subr.bf16.mxu0 0
    %221 = vmatpush1.bf16.msra.mxu0 0
    %222 = vmatprep.subr.bf16.mxu0 0
    %223 = vmatpush1.bf16.msra.mxu0 0
    %224 = vmatprep.mubr.bf16.mxu0 0
    %225 = vmatmul.mubr.bf16.gmra.mrb[0].mxu0 %v115
    %v226 = vpop.f32.mrb[0].mxu0
    %v227 = vadd.f32 %v178, %v226
    %v228 = vpop.f32.mrb[0].mxu0
    %v229 = vpop.f32.mrb[0].mxu0
    %v230 = vadd.f32 %v178, %v229
    %v231 = vpop.f32.mrb[0].mxu0
    %232 = vdwg.mxu0
    %v233 = vpack.c.bf16 %v230, %v227
    %v235 = vunpack.c.l.b16 %v233
    %v236 = vunpack.c.h.b16 %v233
    %v237 = vpack.c.b16 %v235, %v235
    %v238 = vpack.c.b16 %v236, %v236
    %241 = vst.msk [vmem:[#allocation11] sm:$0xf] %vm166, %v237
    %242 = vst.msk [vmem:[#allocation11 + $0x4] sm:$0xf] %vm166, %v238
    %v243 = vld [vmem:[#allocation8] sm:$0xf]
    %v244 = vld [vmem:[#allocation8 + $0x4] sm:$0xf]
    %v245 = vld [vmem:[#allocation8 + $0x8] sm:$0xf]
    %v246 = vld [vmem:[#allocation8 + $0xc] sm:$0xf]
    %v247 = vld [vmem:[%s6] sm:$0x1]
    %v249 = vlaneseq
    %v250 = vshrl.u32 %v249, 7
    %v251 = vsub.s32 0, %v250
    %v252 = vrot.slane %v247, %v251
    %v258 = vunpack.c.l.b16 %v243
    %v259 = vunpack.c.l.b16 %v244
    %v260 = vunpack.c.l.b16 %v245
    %v261 = vunpack.c.l.b16 %v246
    %v262 = vpack.c.b16 %v259, %v258
    %v263 = vpack.c.b16 %v261, %v260
    %266 = vmatprep.subr.bf16.mxu0 0
    %267 = vmatpush1.bf16.msra.mxu0 %v262
    %268 = vmatprep.subr.bf16.mxu0 0
    %269 = vmatpush1.bf16.msra.mxu0 %v263
    %270 = vmatprep.subr.bf16.mxu0 0
    %271 = vmatpush1.bf16.msra.mxu0 0
    %272 = vmatprep.subr.bf16.mxu0 0
    %273 = vmatpush1.bf16.msra.mxu0 0
    %274 = vmatprep.subr.bf16.mxu0 0
    %275 = vmatpush1.bf16.msra.mxu0 0
    %276 = vmatprep.subr.bf16.mxu0 0
    %277 = vmatpush1.bf16.msra.mxu0 0
    %278 = vmatprep.subr.bf16.mxu0 0
    %279 = vmatpush1.bf16.msra.mxu0 0
    %280 = vmatprep.subr.bf16.mxu0 0
    %281 = vmatpush1.bf16.msra.mxu0 0
    %282 = vmatprep.subr.bf16.mxu0 0
    %283 = vmatpush1.bf16.msra.mxu0 0
    %284 = vmatprep.subr.bf16.mxu0 0
    %285 = vmatpush1.bf16.msra.mxu0 0
    %286 = vmatprep.subr.bf16.mxu0 0
    %287 = vmatpush1.bf16.msra.mxu0 0
    %288 = vmatprep.subr.bf16.mxu0 0
    %289 = vmatpush1.bf16.msra.mxu0 0
    %290 = vmatprep.subr.bf16.mxu0 0
    %291 = vmatpush1.bf16.msra.mxu0 0
    %292 = vmatprep.subr.bf16.mxu0 0
    %293 = vmatpush1.bf16.msra.mxu0 0
    %294 = vmatprep.subr.bf16.mxu0 0
    %295 = vmatpush1.bf16.msra.mxu0 0
    %296 = vmatprep.subr.bf16.mxu0 0
    %297 = vmatpush1.bf16.msra.mxu0 0
    %298 = vmatprep.mubr.bf16.mxu0 0
    %299 = vmatmul.mubr.bf16.gmra.mrb[0].mxu0 %v115
    %v300 = vpop.f32.mrb[0].mxu0
    %v301 = vadd.f32 %v252, %v300
    %v302 = vpop.f32.mrb[0].mxu0
    %v303 = vpop.f32.mrb[0].mxu0
    %v304 = vadd.f32 %v252, %v303
    %v305 = vpop.f32.mrb[0].mxu0
    %306 = vdwg.mxu0
    %v307 = vpack.c.bf16 %v304, %v301
    %v309 = vunpack.c.l.b16 %v307
    %v310 = vunpack.c.h.b16 %v307
    %v311 = vpack.c.b16 %v309, %v309
    %v312 = vpack.c.b16 %v310, %v310
    %315 = vst.msk [vmem:[#allocation13] sm:$0xf] %vm166, %v311
    %316 = vst.msk [vmem:[#allocation13 + $0x4] sm:$0xf] %vm166, %v312
    // Predicated region
    $region46: #{tpu_custom_call.1} parent=1 // pred_check
      _
    $region47: #{tpu_custom_call.1} parent=1 // pred_check_branch
      %318 = sbr.rel (0) target = $region49
    $region48: #{tpu_custom_call.1} parent=1 // pred_region
      %s320 = ssub.s32 128, 128
      %321 = vsyncadd [#allocation4], %s320
      %s322 = sshll.u32 [#allocation10], 4
      %s323 = int_to_ptr.vmem [resolvable:$true] %s322
      %328 = dma.vmem_to_hbm [thread:$0]  %s323, 128, %s7, [#allocation4], 64, 64, 4
    $region49: #{tpu_custom_call.1} parent=1 // pred_fallthru
      _
    // Predicated region
    $region50: #{tpu_custom_call.1} parent=1 // pred_check
      _
    $region51: #{tpu_custom_call.1} parent=1 // pred_check_branch
      %330 = sbr.rel (0) target = $region53
    $region52: #{tpu_custom_call.1} parent=1 // pred_region
      %s332 = ssub.s32 128, 128
      %333 = vsyncadd [#allocation12], %s332
      %s334 = sshll.u32 [#allocation11], 4
      %s335 = int_to_ptr.vmem [resolvable:$true] %s334
      %340 = dma.vmem_to_hbm [thread:$0]  %s335, 128, %s8, [#allocation12], 64, 64, 4
    $region53: #{tpu_custom_call.1} parent=1 // pred_fallthru
      _
    // Predicated region
    $region54: #{tpu_custom_call.1} parent=1 // pred_check
      _
    $region55: #{tpu_custom_call.1} parent=1 // pred_check_branch
      %342 = sbr.rel (0) target = $region57
    $region56: #{tpu_custom_call.1} parent=1 // pred_region
      %s344 = ssub.s32 128, 128
      %345 = vsyncadd [#allocation12], %s344
      %s346 = sshll.u32 [#allocation13], 4
      %s347 = int_to_ptr.vmem [resolvable:$true] %s346
      %352 = dma.vmem_to_hbm [thread:$0]  %s347, 128, %s9, [#allocation12], 64, 64, 4
    $region57: #{tpu_custom_call.1} parent=1 // pred_fallthru
      _
    // Predicated region
    $region58: #{tpu_custom_call.1} parent=1 // pred_check
      _
    $region59: #{tpu_custom_call.1} parent=1 // pred_check_branch
      %354 = sbr.rel (0) target = $region61
    $region60: #{tpu_custom_call.1} parent=1 // pred_region
      %355 = dma.done [#allocation4], 128
    $region61: #{tpu_custom_call.1} parent=1 // pred_fallthru
      _
    // Predicated region
    $region62: #{tpu_custom_call.1} parent=1 // pred_check
      _
    $region63: #{tpu_custom_call.1} parent=1 // pred_check_branch
      %357 = sbr.rel (0) target = $region65
    $region64: #{tpu_custom_call.1} parent=1 // pred_region
      %358 = dma.done [#allocation12], 128
    $region65: #{tpu_custom_call.1} parent=1 // pred_fallthru
      _
    // Predicated region
    $region66: #{tpu_custom_call.1} parent=1 // pred_check
      _
    $region67: #{tpu_custom_call.1} parent=1 // pred_check_branch
      %360 = sbr.rel (0) target = $region69
    $region68: #{tpu_custom_call.1} parent=1 // pred_region
      %361 = dma.done [#allocation12], 128
    $region69: #{tpu_custom_call.1} parent=1 // pred_fallthru
      _
    %362 = vsyncpa [#allocation3], 1
    %363 = vsyncpa [#allocation6], 1
    %364 = vsyncpa [#allocation9], 1
    %365 = vsyncpa [#allocation4], 1
    %366 = vsyncpa [#allocation12], 1

</llo_original>
